<compile_context>
chip_gen: v7x
topology: tpu7x:2x2x1
jax: 0.10.0
libtpu: 0.0.40
codegen_flags: <defaults>
</compile_context>

<pallas_src>
import jax
import jax.numpy as jnp
from jax import lax
from jax.experimental import pallas as pl
from jax.experimental.pallas import tpu as pltpu

_SUBLANE = 8
_HBM_DMA_SLOTS = 8  # in-flight row DMAs in the HBM-gather path


def _round_up(x, m):
    return ((x + m - 1) // m) * m


def _vmem_capacity_bytes():
    # Generation-aware VMEM clamp (v5e/v6e: 128 MiB, v7x: 64 MiB per core).
    try:
        return int(pltpu.get_tpu_info().vmem_capacity_bytes)
    except Exception:
        return 64 * 1024 * 1024  # conservative default when no TPU is attached


def _dropout_slab(slab, bits, threshold_u32, inv_keep, out_dtype):
    # Inverted dropout, integer-threshold compare on raw uint32 bits.
    keep = bits >= jnp.uint32(threshold_u32)
    vals = jnp.where(keep, slab.astype(jnp.float32) * jnp.float32(inv_keep),
                     jnp.float32(0.0))
    return vals.astype(out_dtype)


def _make_vmem_kernel(token_tile, vocab, has_dropout, threshold_u32, inv_keep,
                      out_dtype):
    """Gather from a VMEM-resident table, 8-row slab at a time."""
    n_slabs = token_tile // _SUBLANE

    def kernel(idx_ref, table_ref, *rest):
        # idx_ref:   SMEM (n_pad,) int32 token ids (scalar prefetch, per chunk)
        # table_ref: VMEM (V, E) full table, resident & single-buffered
        # bits_ref:  VMEM (token_tile, E) uint32 (only when dropout enabled)
        # out_ref:   VMEM (token_tile, E)
        if has_dropout:
            bits_ref, out_ref = rest
        else:
            (out_ref,) = rest
        base = pl.program_id(0) * token_tile

        def do_slab(s, carry):
            row0 = s * _SUBLANE  # multiple of 8 by construction -> aligned store
            rows = []
            for j in range(_SUBLANE):  # static unroll: 8 dynamic row loads
                tok = jnp.clip(idx_ref[base + row0 + j], 0, vocab - 1)
                rows.append(table_ref[pl.ds(tok, 1), :])
            slab = jnp.concatenate(rows, axis=0)  # (8, E)
            if has_dropout:
                slab = _dropout_slab(slab, bits_ref[pl.ds(row0, _SUBLANE), :],
                                     threshold_u32, inv_keep, out_dtype)
            out_ref[pl.ds(row0, _SUBLANE), :] = slab.astype(out_dtype)
            return carry

        lax.fori_loop(0, n_slabs, do_slab, 0, unroll=2)

    return kernel


def _make_hbm_kernel(token_tile, vocab, has_dropout, threshold_u32, inv_keep,
                     out_dtype, n_slots=_HBM_DMA_SLOTS):
    """Gather rows straight from the HBM table via rotating in-flight DMAs."""
    n_prime = min(n_slots, token_tile)
    n_steady = max(token_tile - n_slots, 0)

    def kernel(idx_ref, table_hbm, *rest):
        if has_dropout:
            bits_ref, out_ref, sem = rest
        else:
            out_ref, sem = rest
        base = pl.program_id(0) * token_tile

        def row_copy(j, slot):
            tok = jnp.clip(idx_ref[base + j], 0, vocab - 1)
            return pltpu.make_async_copy(table_hbm.at[pl.ds(tok, 1), :],
                                         out_ref.at[pl.ds(j, 1), :],
                                         sem.at[slot])

        def wait_slot(slot):
            # Same-shaped descriptor: the wait only depends on transfer size.
            pltpu.make_async_copy(table_hbm.at[pl.ds(0, 1), :],
                                  out_ref.at[pl.ds(0, 1), :],
                                  sem.at[slot]).wait()

        def prime(j, c):
            row_copy(j, j % n_slots).start()
            return c

        lax.fori_loop(0, n_prime, prime, 0, unroll=True)

        def steady(j, c):
            slot = j % n_slots
            wait_slot(slot)                       # row j landed
            row_copy(j + n_slots, slot).start()   # reuse slot for row j+n_slots
            return c

        lax.fori_loop(0, n_steady, steady, 0)

        def drain(j, c):
            wait_slot(j % n_slots)
            return c

        lax.fori_loop(n_steady, token_tile, drain, 0)

        if has_dropout:
            out_ref[...] = _dropout_slab(out_ref[...], bits_ref[...],
                                         threshold_u32, inv_keep, out_dtype)

    return kernel


def simple_embedding(x, word_vectors, p_drop=0.0, seed=0, *,
                     token_tile=1024, max_tokens_per_call=32768,
                     force_hbm_gather=False):
    """Pallas equivalent of Simple_Embedding.forward: dropout(embed(x))."""
    assert 0.0 <= p_drop < 1.0, "p_drop must be in [0, 1)"
    B, S = x.shape
    V, E = word_vectors.shape
    N = B * S
    out_dtype = word_vectors.dtype
    itemsize = jnp.dtype(out_dtype).itemsize

    has_dropout = p_drop > 0.0
    threshold_u32 = int(round(float(p_drop) * float(1 << 32))) if has_dropout else 0
    inv_keep = 1.0 / (1.0 - float(p_drop)) if has_dropout else 1.0
    key = jax.random.PRNGKey(seed) if has_dropout else None

    idx_all = x.reshape(N).astype(jnp.int32)
    vmem_cap = _vmem_capacity_bytes()
    table_bytes = V * E * itemsize

    chunks = []
    num_chunks = -(-N // max_tokens_per_call)
    for c in range(num_chunks):
        lo = c * max_tokens_per_call
        n_chunk = min(max_tokens_per_call, N - lo)
        idx = idx_all[lo:lo + n_chunk]

        tn = _round_up(min(token_tile, n_chunk), _SUBLANE)
        n_pad = _round_up(n_chunk, tn)
        num_tiles = n_pad // tn
        if n_pad != n_chunk:
            idx = jnp.pad(idx, (0, n_pad - n_chunk))  # token 0; rows sliced off

        out_bytes = 2 * tn * E * itemsize                    # double-buffered out
        bits_bytes = (2 * tn * E * 4) if has_dropout else 0  # double-buffered bits
        resident_need = table_bytes + out_bytes + bits_bytes + (1 << 20)
        use_hbm = force_hbm_gather or resident_need > int(0.85 * vmem_cap)

        if use_hbm:
            table_spec = pl.BlockSpec(memory_space=pl.ANY)   # stays in HBM
            scratch = [pltpu.SemaphoreType.DMA((_HBM_DMA_SLOTS,))]
            vmem_need = out_bytes + bits_bytes + (2 << 20)
            kernel = _make_hbm_kernel(tn, V, has_dropout, threshold_u32,
                                      inv_keep, out_dtype)
        else:
            # Constant block index -> fetched once; single-buffered.
            table_spec = pl.BlockSpec((V, E), lambda i, idx_ref: (0, 0),
                                      pipeline_mode=pl.Buffered(1))
            scratch = []
            vmem_need = resident_need
            kernel = _make_vmem_kernel(tn, V, has_dropout, threshold_u32,
                                       inv_keep, out_dtype)

        operands = [idx, word_vectors]
        in_specs = [table_spec]
        if has_dropout:
            ckey = jax.random.fold_in(key, c)
            bits = jax.random.bits(ckey, (n_pad, E), dtype=jnp.uint32)
            operands.append(bits)
            in_specs.append(pl.BlockSpec((tn, E), lambda i, idx_ref: (i, 0)))

        vmem_limit = int(min(max(vmem_need, 8 << 20), int(0.9 * vmem_cap)))

        out = pl.pallas_call(
            kernel,
            out_shape=jax.ShapeDtypeStruct((n_pad, E), out_dtype),
            grid_spec=pltpu.PrefetchScalarGridSpec(
                num_scalar_prefetch=1,              # token indices -> SMEM
                grid=(num_tiles,),
                in_specs=in_specs,
                out_specs=pl.BlockSpec((tn, E), lambda i, idx_ref: (i, 0)),
                scratch_shapes=scratch,
            ),
            compiler_params=pltpu.CompilerParams(
                dimension_semantics=("parallel",),
                vmem_limit_bytes=vmem_limit,
            ),
        )(*operands)

        chunks.append(out[:n_chunk])

    full = chunks[0] if len(chunks) == 1 else jnp.concatenate(chunks, axis=0)
    return full.reshape(B, S, E)


if __name__ == "__main__":
    key = jax.random.PRNGKey(0)
    k_wv, k_idx, k_wv2, k_idx2 = jax.random.split(key, 4)

    # --- case 1: lane-aligned E, p_drop = 0, resident-table path --------------
    V, E, B, S = 64, 128, 2, 8
    wv = jax.random.normal(k_wv, (V, E), dtype=jnp.float32)
    x = jax.random.randint(k_idx, (B, S), 0, V, dtype=jnp.int32)
    out = jax.block_until_ready(simple_embedding(x, wv))
    ref = wv[x]
    assert out.shape == (B, S, E), out.shape
    assert jnp.allclose(out, ref, atol=1e-6, rtol=1e-6), "mismatch vs gather"

    # --- case 2: unaligned E / N (padding path) + fused dropout ---------------
    V2, E2, B2, S2 = 80, 96, 2, 10
    wv2 = jax.random.normal(k_wv2, (V2, E2), dtype=jnp.float32)
    x2 = jax.random.randint(k_idx2, (B2, S2), 0, V2, dtype=jnp.int32)
    out2 = jax.block_until_ready(simple_embedding(x2, wv2))
    ref2 = wv2[x2]
    assert out2.shape == (B2, S2, E2), out2.shape
    assert jnp.allclose(out2, ref2, atol=1e-6, rtol=1e-6), "padded-path mismatch"

    p = 0.5
    out_do = jax.block_until_ready(simple_embedding(x2, wv2, p_drop=p, seed=123))
    scaled = ref2 / (1.0 - p)
    ok = jnp.isclose(out_do, 0.0, atol=1e-6) | jnp.isclose(
        out_do, scaled, atol=1e-5, rtol=1e-4)
    assert bool(jnp.all(ok)), "dropout output is neither 0 nor scaled embedding"
    drop_frac = float(jnp.mean(jnp.isclose(out_do, 0.0, atol=1e-6)))
    assert 0.2 < drop_frac < 0.8, f"implausible drop fraction {drop_frac}"

    # --- case 3: wrapper-level chunking of the token stream -------------------
    out_chunked = jax.block_until_ready(
        simple_embedding(x, wv, max_tokens_per_call=8))
    assert jnp.allclose(out_chunked, ref, atol=1e-6, rtol=1e-6), "chunking mismatch"

    # --- case 4: forced HBM-gather path (v7x-style: table too big for VMEM) ---
    out_hbm = jax.block_until_ready(
        simple_embedding(x2, wv2, force_hbm_gather=True))
    assert jnp.allclose(out_hbm, ref2, atol=1e-6, rtol=1e-6), "HBM-gather mismatch"
    out_hbm_do = jax.block_until_ready(
        simple_embedding(x2, wv2, p_drop=p, seed=123, force_hbm_gather=True))
    assert jnp.allclose(out_hbm_do, out_do, atol=1e-6, rtol=1e-6), \
        "HBM-gather dropout mismatch"

    print("KERNEL_OK")
</pallas_src>

<mosaic_0001>
module attributes {stable_mosaic.version = 11 : i64} {
  func.func @kernel(%arg0: i32, %arg1: memref<16xi32, #tpu.memory_space<smem>>, %arg2: memref<64x128xf32, #tpu.memory_space<vmem>>, %arg3: memref<16x128xf32, #tpu.memory_space<vmem>>) attributes {dimension_semantics = [#tpu.dimension_semantics<parallel>], iteration_bounds = array<i64: 1>, scalar_prefetch = 1 : i64, scratch_operands = 0 : i64, tpu.core_type = #tpu.core_type<tc>, window_params = [{pipeline_mode = #tpu.pipeline_mode<synchronous>, transform_indices = @transform_0, window_bounds = array<i64: 64, 128>}, {transform_indices = @transform_1, window_bounds = array<i64: 16, 128>}]} {
    %c16_i32 = arith.constant 16 : i32
    %0 = arith.muli %arg0, %c16_i32 : i32
    %c0_i32 = arith.constant 0 : i32
    %c8_i32 = arith.constant 8 : i32
    %1 = arith.muli %c0_i32, %c8_i32 : i32
    %2 = arith.addi %0, %1 : i32
    %c0_i32_0 = arith.constant 0 : i32
    %3 = arith.addi %2, %c0_i32_0 : i32
    %4 = arith.index_cast %3 : i32 to index
    %5 = memref.load %arg1[%4] : memref<16xi32, #tpu.memory_space<smem>>
    %c0_i32_1 = arith.constant 0 : i32
    %c63_i32 = arith.constant 63 : i32
    %6 = arith.maxsi %c0_i32_1, %5 : i32
    %7 = arith.minsi %c63_i32, %6 : i32
    %8 = arith.index_cast %7 : i32 to index
    %c0 = arith.constant 0 : index
    %9 = vector.load %arg2[%8, %c0] : memref<64x128xf32, #tpu.memory_space<vmem>>, vector<1x128xf32>
    %10 = arith.addi %0, %1 : i32
    %c1_i32 = arith.constant 1 : i32
    %11 = arith.addi %10, %c1_i32 : i32
    %12 = arith.index_cast %11 : i32 to index
    %13 = memref.load %arg1[%12] : memref<16xi32, #tpu.memory_space<smem>>
    %c0_i32_2 = arith.constant 0 : i32
    %c63_i32_3 = arith.constant 63 : i32
    %14 = arith.maxsi %c0_i32_2, %13 : i32
    %15 = arith.minsi %c63_i32_3, %14 : i32
    %16 = arith.index_cast %15 : i32 to index
    %c0_4 = arith.constant 0 : index
    %17 = vector.load %arg2[%16, %c0_4] : memref<64x128xf32, #tpu.memory_space<vmem>>, vector<1x128xf32>
    %18 = arith.addi %0, %1 : i32
    %c2_i32 = arith.constant 2 : i32
    %19 = arith.addi %18, %c2_i32 : i32
    %20 = arith.index_cast %19 : i32 to index
    %21 = memref.load %arg1[%20] : memref<16xi32, #tpu.memory_space<smem>>
    %c0_i32_5 = arith.constant 0 : i32
    %c63_i32_6 = arith.constant 63 : i32
    %22 = arith.maxsi %c0_i32_5, %21 : i32
    %23 = arith.minsi %c63_i32_6, %22 : i32
    %24 = arith.index_cast %23 : i32 to index
    %c0_7 = arith.constant 0 : index
    %25 = vector.load %arg2[%24, %c0_7] : memref<64x128xf32, #tpu.memory_space<vmem>>, vector<1x128xf32>
    %26 = arith.addi %0, %1 : i32
    %c3_i32 = arith.constant 3 : i32
    %27 = arith.addi %26, %c3_i32 : i32
    %28 = arith.index_cast %27 : i32 to index
    %29 = memref.load %arg1[%28] : memref<16xi32, #tpu.memory_space<smem>>
    %c0_i32_8 = arith.constant 0 : i32
    %c63_i32_9 = arith.constant 63 : i32
    %30 = arith.maxsi %c0_i32_8, %29 : i32
    %31 = arith.minsi %c63_i32_9, %30 : i32
    %32 = arith.index_cast %31 : i32 to index
    %c0_10 = arith.constant 0 : index
    %33 = vector.load %arg2[%32, %c0_10] : memref<64x128xf32, #tpu.memory_space<vmem>>, vector<1x128xf32>
    %34 = arith.addi %0, %1 : i32
    %c4_i32 = arith.constant 4 : i32
    %35 = arith.addi %34, %c4_i32 : i32
    %36 = arith.index_cast %35 : i32 to index
    %37 = memref.load %arg1[%36] : memref<16xi32, #tpu.memory_space<smem>>
    %c0_i32_11 = arith.constant 0 : i32
    %c63_i32_12 = arith.constant 63 : i32
    %38 = arith.maxsi %c0_i32_11, %37 : i32
    %39 = arith.minsi %c63_i32_12, %38 : i32
    %40 = arith.index_cast %39 : i32 to index
    %c0_13 = arith.constant 0 : index
    %41 = vector.load %arg2[%40, %c0_13] : memref<64x128xf32, #tpu.memory_space<vmem>>, vector<1x128xf32>
    %42 = arith.addi %0, %1 : i32
    %c5_i32 = arith.constant 5 : i32
    %43 = arith.addi %42, %c5_i32 : i32
    %44 = arith.index_cast %43 : i32 to index
    %45 = memref.load %arg1[%44] : memref<16xi32, #tpu.memory_space<smem>>
    %c0_i32_14 = arith.constant 0 : i32
    %c63_i32_15 = arith.constant 63 : i32
    %46 = arith.maxsi %c0_i32_14, %45 : i32
    %47 = arith.minsi %c63_i32_15, %46 : i32
    %48 = arith.index_cast %47 : i32 to index
    %c0_16 = arith.constant 0 : index
    %49 = vector.load %arg2[%48, %c0_16] : memref<64x128xf32, #tpu.memory_space<vmem>>, vector<1x128xf32>
    %50 = arith.addi %0, %1 : i32
    %c6_i32 = arith.constant 6 : i32
    %51 = arith.addi %50, %c6_i32 : i32
    %52 = arith.index_cast %51 : i32 to index
    %53 = memref.load %arg1[%52] : memref<16xi32, #tpu.memory_space<smem>>
    %c0_i32_17 = arith.constant 0 : i32
    %c63_i32_18 = arith.constant 63 : i32
    %54 = arith.maxsi %c0_i32_17, %53 : i32
    %55 = arith.minsi %c63_i32_18, %54 : i32
    %56 = arith.index_cast %55 : i32 to index
    %c0_19 = arith.constant 0 : index
    %57 = vector.load %arg2[%56, %c0_19] : memref<64x128xf32, #tpu.memory_space<vmem>>, vector<1x128xf32>
    %58 = arith.addi %0, %1 : i32
    %c7_i32 = arith.constant 7 : i32
    %59 = arith.addi %58, %c7_i32 : i32
    %60 = arith.index_cast %59 : i32 to index
    %61 = memref.load %arg1[%60] : memref<16xi32, #tpu.memory_space<smem>>
    %c0_i32_20 = arith.constant 0 : i32
    %c63_i32_21 = arith.constant 63 : i32
    %62 = arith.maxsi %c0_i32_20, %61 : i32
    %63 = arith.minsi %c63_i32_21, %62 : i32
    %64 = arith.index_cast %63 : i32 to index
    %c0_22 = arith.constant 0 : index
    %65 = vector.load %arg2[%64, %c0_22] : memref<64x128xf32, #tpu.memory_space<vmem>>, vector<1x128xf32>
    %66 = tpu.concatenate %9, %17, %25, %33, %41, %49, %57, %65 in 0 : vector<1x128xf32>, vector<1x128xf32>, vector<1x128xf32>, vector<1x128xf32>, vector<1x128xf32>, vector<1x128xf32>, vector<1x128xf32>, vector<1x128xf32> -> vector<8x128xf32>
    %67 = arith.index_cast %1 : i32 to index
    %c0_23 = arith.constant 0 : index
    %68 = vector.load %arg3[%67, %c0_23] : memref<16x128xf32, #tpu.memory_space<vmem>>, vector<8x128xf32>
    tpu.vector_store %arg3[%67, %c0_23], %66 {strides = array<i32>} : memref<16x128xf32, #tpu.memory_space<vmem>>, vector<8x128xf32>,
    %c1_i32_24 = arith.constant 1 : i32
    %c8_i32_25 = arith.constant 8 : i32
    %69 = arith.muli %c1_i32_24, %c8_i32_25 : i32
    %70 = arith.addi %0, %69 : i32
    %c0_i32_26 = arith.constant 0 : i32
    %71 = arith.addi %70, %c0_i32_26 : i32
    %72 = arith.index_cast %71 : i32 to index
    %73 = memref.load %arg1[%72] : memref<16xi32, #tpu.memory_space<smem>>
    %c0_i32_27 = arith.constant 0 : i32
    %c63_i32_28 = arith.constant 63 : i32
    %74 = arith.maxsi %c0_i32_27, %73 : i32
    %75 = arith.minsi %c63_i32_28, %74 : i32
    %76 = arith.index_cast %75 : i32 to index
    %c0_29 = arith.constant 0 : index
    %77 = vector.load %arg2[%76, %c0_29] : memref<64x128xf32, #tpu.memory_space<vmem>>, vector<1x128xf32>
    %78 = arith.addi %0, %69 : i32
    %c1_i32_30 = arith.constant 1 : i32
    %79 = arith.addi %78, %c1_i32_30 : i32
    %80 = arith.index_cast %79 : i32 to index
    %81 = memref.load %arg1[%80] : memref<16xi32, #tpu.memory_space<smem>>
    %c0_i32_31 = arith.constant 0 : i32
    %c63_i32_32 = arith.constant 63 : i32
    %82 = arith.maxsi %c0_i32_31, %81 : i32
    %83 = arith.minsi %c63_i32_32, %82 : i32
    %84 = arith.index_cast %83 : i32 to index
    %c0_33 = arith.constant 0 : index
    %85 = vector.load %arg2[%84, %c0_33] : memref<64x128xf32, #tpu.memory_space<vmem>>, vector<1x128xf32>
    %86 = arith.addi %0, %69 : i32
    %c2_i32_34 = arith.constant 2 : i32
    %87 = arith.addi %86, %c2_i32_34 : i32
    %88 = arith.index_cast %87 : i32 to index
    %89 = memref.load %arg1[%88] : memref<16xi32, #tpu.memory_space<smem>>
    %c0_i32_35 = arith.constant 0 : i32
    %c63_i32_36 = arith.constant 63 : i32
    %90 = arith.maxsi %c0_i32_35, %89 : i32
    %91 = arith.minsi %c63_i32_36, %90 : i32
    %92 = arith.index_cast %91 : i32 to index
    %c0_37 = arith.constant 0 : index
    %93 = vector.load %arg2[%92, %c0_37] : memref<64x128xf32, #tpu.memory_space<vmem>>, vector<1x128xf32>
    %94 = arith.addi %0, %69 : i32
    %c3_i32_38 = arith.constant 3 : i32
    %95 = arith.addi %94, %c3_i32_38 : i32
    %96 = arith.index_cast %95 : i32 to index
    %97 = memref.load %arg1[%96] : memref<16xi32, #tpu.memory_space<smem>>
    %c0_i32_39 = arith.constant 0 : i32
    %c63_i32_40 = arith.constant 63 : i32
    %98 = arith.maxsi %c0_i32_39, %97 : i32
    %99 = arith.minsi %c63_i32_40, %98 : i32
    %100 = arith.index_cast %99 : i32 to index
    %c0_41 = arith.constant 0 : index
    %101 = vector.load %arg2[%100, %c0_41] : memref<64x128xf32, #tpu.memory_space<vmem>>, vector<1x128xf32>
    %102 = arith.addi %0, %69 : i32
    %c4_i32_42 = arith.constant 4 : i32
    %103 = arith.addi %102, %c4_i32_42 : i32
    %104 = arith.index_cast %103 : i32 to index
    %105 = memref.load %arg1[%104] : memref<16xi32, #tpu.memory_space<smem>>
    %c0_i32_43 = arith.constant 0 : i32
    %c63_i32_44 = arith.constant 63 : i32
    %106 = arith.maxsi %c0_i32_43, %105 : i32
    %107 = arith.minsi %c63_i32_44, %106 : i32
    %108 = arith.index_cast %107 : i32 to index
    %c0_45 = arith.constant 0 : index
    %109 = vector.load %arg2[%108, %c0_45] : memref<64x128xf32, #tpu.memory_space<vmem>>, vector<1x128xf32>
    %110 = arith.addi %0, %69 : i32
    %c5_i32_46 = arith.constant 5 : i32
    %111 = arith.addi %110, %c5_i32_46 : i32
    %112 = arith.index_cast %111 : i32 to index
    %113 = memref.load %arg1[%112] : memref<16xi32, #tpu.memory_space<smem>>
    %c0_i32_47 = arith.constant 0 : i32
    %c63_i32_48 = arith.constant 63 : i32
    %114 = arith.maxsi %c0_i32_47, %113 : i32
    %115 = arith.minsi %c63_i32_48, %114 : i32
    %116 = arith.index_cast %115 : i32 to index
    %c0_49 = arith.constant 0 : index
    %117 = vector.load %arg2[%116, %c0_49] : memref<64x128xf32, #tpu.memory_space<vmem>>, vector<1x128xf32>
    %118 = arith.addi %0, %69 : i32
    %c6_i32_50 = arith.constant 6 : i32
    %119 = arith.addi %118, %c6_i32_50 : i32
    %120 = arith.index_cast %119 : i32 to index
    %121 = memref.load %arg1[%120] : memref<16xi32, #tpu.memory_space<smem>>
    %c0_i32_51 = arith.constant 0 : i32
    %c63_i32_52 = arith.constant 63 : i32
    %122 = arith.maxsi %c0_i32_51, %121 : i32
    %123 = arith.minsi %c63_i32_52, %122 : i32
    %124 = arith.index_cast %123 : i32 to index
    %c0_53 = arith.constant 0 : index
    %125 = vector.load %arg2[%124, %c0_53] : memref<64x128xf32, #tpu.memory_space<vmem>>, vector<1x128xf32>
    %126 = arith.addi %0, %69 : i32
    %c7_i32_54 = arith.constant 7 : i32
    %127 = arith.addi %126, %c7_i32_54 : i32
    %128 = arith.index_cast %127 : i32 to index
    %129 = memref.load %arg1[%128] : memref<16xi32, #tpu.memory_space<smem>>
    %c0_i32_55 = arith.constant 0 : i32
    %c63_i32_56 = arith.constant 63 : i32
    %130 = arith.maxsi %c0_i32_55, %129 : i32
    %131 = arith.minsi %c63_i32_56, %130 : i32
    %132 = arith.index_cast %131 : i32 to index
    %c0_57 = arith.constant 0 : index
    %133 = vector.load %arg2[%132, %c0_57] : memref<64x128xf32, #tpu.memory_space<vmem>>, vector<1x128xf32>
    %134 = tpu.concatenate %77, %85, %93, %101, %109, %117, %125, %133 in 0 : vector<1x128xf32>, vector<1x128xf32>, vector<1x128xf32>, vector<1x128xf32>, vector<1x128xf32>, vector<1x128xf32>, vector<1x128xf32>, vector<1x128xf32> -> vector<8x128xf32>
    %135 = arith.index_cast %69 : i32 to index
    %c0_58 = arith.constant 0 : index
    %136 = vector.load %arg3[%135, %c0_58] : memref<16x128xf32, #tpu.memory_space<vmem>>, vector<8x128xf32>
    tpu.vector_store %arg3[%135, %c0_58], %134 {strides = array<i32>} : memref<16x128xf32, #tpu.memory_space<vmem>>, vector<8x128xf32>,
    %c2_i32_59 = arith.constant 2 : i32
    return
  }
  func.func @transform_0(%arg0: i32, %arg1: memref<16xi32, #tpu.memory_space<smem>>) -> (i32, i32) {
    %c0_i32 = arith.constant 0 : i32
    %c0_i32_0 = arith.constant 0 : i32
    %c0_i32_1 = arith.constant 0 : i32
    return %c0_i32, %c0_i32_0 : i32, i32
  }
  func.func @transform_1(%arg0: i32, %arg1: memref<16xi32, #tpu.memory_space<smem>>) -> (i32, i32) {
    %c0_i32 = arith.constant 0 : i32
    %c0_i32_0 = arith.constant 0 : i32
    return %arg0, %c0_i32 : i32, i32
  }
}

</mosaic_0001>

<llo_original>
// kernel: tpu_custom_call.1
$region0: #{tpu_custom_call.1}
  #allocation0 [shape = 'u32[]', space=smem, size = 0x4, offset = 0x4, fixed_abs, tag = 'smem constant byte address 0x4 - core index']
  #allocation1 [shape = 'u32[144,128]{1,0:T(1,128)}', space=vmem, size = 0x12000, scoped, tag = 'internal scratch']
  #allocation2 [shape = 's32[1]{0}', space=sflag, size = 0x4, scoped, tag = 'scoped memory for tpu_custom_call.1']
  #allocation3 [shape = 'u8[512]{0}', space=smem, size = 0x200, scoped, tag = 'prefetched SMEM operand 0']
  %s0 = inlined_call_operand.hbm [shape: s32[16], index: 0, kind: input, shape index: {}]
  %s1 = inlined_call_operand.hbm [shape: f32[64,128], index: 1, kind: input, shape index: {}]
  %s2 = inlined_call_operand.hbm [shape: f32[16,128], index: 2, kind: output, shape index: {}]
  %s3 = sld [smem:[#allocation0]]
  $region18: #{tpu_custom_call.1} parent=0
    _
  %s5 = ssub.s32 1, %s3
  %s6 = scalar_select 0, %s5, %s3
  %8 = dma.hbm_to_smem %s0, 16, [#allocation3], [#allocation2]
  %9 = dma.done [#allocation2], 16
  %10 = sfence
  $region1: #{tpu_custom_call.1} parent=0
    #allocation4 [shape = 'u8[32768]{0}', space=vmem, size = 0x8000, scoped, tag = 'input window, operand 1, single buffered']
    #allocation5 [shape = 's32[1]{0}', space=sflag, size = 0x4, scoped, tag = 'scoped memory for tpu_custom_call.1']
    #allocation6 [shape = 's32[1]{0}', space=sflag, size = 0x4, scoped, tag = 'scoped memory for tpu_custom_call.1']
    #allocation7 [shape = 'u8[8192]{0}', space=vmem, size = 0x2000, scoped, tag = 'output window, operand 0, single buffered']
    %11 = vsyncpa [#allocation5], 0
    %12 = vsyncpa [#allocation6], 0
    // Predicated region
    $region2: #{tpu_custom_call.1} parent=1 // pred_check
      _
    $region3: #{tpu_custom_call.1} parent=1 // pred_check_branch
      %14 = sbr.rel (0) target = $region5
    $region4: #{tpu_custom_call.1} parent=1 // pred_region
      %s16 = ssub.s32 1024, 1024
      %17 = vsyncadd [#allocation5], %s16
      %s18 = sshll.u32 [#allocation4], 4
      %s19 = int_to_ptr.vmem [resolvable:$true] %s18
      %24 = dma.hbm_to_vmem [thread:$0]  %s1, 1024, %s19, [#allocation5], 128, 128, 8
    $region5: #{tpu_custom_call.1} parent=1 // pred_fallthru
      _
    // Predicated region
    $region6: #{tpu_custom_call.1} parent=1 // pred_check
      _
    $region7: #{tpu_custom_call.1} parent=1 // pred_check_branch
      %26 = sbr.rel (0) target = $region9
    $region8: #{tpu_custom_call.1} parent=1 // pred_region
      %27 = dma.done [#allocation5], 1024
    $region9: #{tpu_custom_call.1} parent=1 // pred_fallthru
      _
    %s28 = smul.u32 0, 16
    %s29 = sld [smem:[#allocation3 + %s28]]
    %p30 = scmp.gt.s32.totalorder %s29, 0
    %s31 = scalar_select %p30, %s29, 0
    %p32 = scmp.lt.s32.totalorder %s31, 63
    %s33 = scalar_select %p32, %s31, 63
    %s34 = scalar_lea.vmem [#allocation4], %s33
    %v35 = vld [vmem:[%s34] sm:$0x1]
    %s36 = sadd.s32 %s28, 1
    %s37 = sld [smem:[#allocation3 + %s36]]
    %p38 = scmp.gt.s32.totalorder %s37, 0
    %s39 = scalar_select %p38, %s37, 0
    %p40 = scmp.lt.s32.totalorder %s39, 63
    %s41 = scalar_select %p40, %s39, 63
    %s42 = scalar_lea.vmem [#allocation4], %s41
    %v43 = vld [vmem:[%s42] sm:$0x1]
    %s44 = sadd.s32 %s28, 2
    %s45 = sld [smem:[#allocation3 + %s44]]
    %p46 = scmp.gt.s32.totalorder %s45, 0
    %s47 = scalar_select %p46, %s45, 0
    %p48 = scmp.lt.s32.totalorder %s47, 63
    %s49 = scalar_select %p48, %s47, 63
    %s50 = scalar_lea.vmem [#allocation4], %s49
    %v51 = vld [vmem:[%s50] sm:$0x1]
    %s52 = sadd.s32 %s28, 3
    %s53 = sld [smem:[#allocation3 + %s52]]
    %p54 = scmp.gt.s32.totalorder %s53, 0
    %s55 = scalar_select %p54, %s53, 0
    %p56 = scmp.lt.s32.totalorder %s55, 63
    %s57 = scalar_select %p56, %s55, 63
    %s58 = scalar_lea.vmem [#allocation4], %s57
    %v59 = vld [vmem:[%s58] sm:$0x1]
    %s60 = sadd.s32 %s28, 4
    %s61 = sld [smem:[#allocation3 + %s60]]
    %p62 = scmp.gt.s32.totalorder %s61, 0
    %s63 = scalar_select %p62, %s61, 0
    %p64 = scmp.lt.s32.totalorder %s63, 63
    %s65 = scalar_select %p64, %s63, 63
    %s66 = scalar_lea.vmem [#allocation4], %s65
    %v67 = vld [vmem:[%s66] sm:$0x1]
    %s68 = sadd.s32 %s28, 5
    %s69 = sld [smem:[#allocation3 + %s68]]
    %p70 = scmp.gt.s32.totalorder %s69, 0
    %s71 = scalar_select %p70, %s69, 0
    %p72 = scmp.lt.s32.totalorder %s71, 63
    %s73 = scalar_select %p72, %s71, 63
    %s74 = scalar_lea.vmem [#allocation4], %s73
    %v75 = vld [vmem:[%s74] sm:$0x1]
    %s76 = sadd.s32 %s28, 6
    %s77 = sld [smem:[#allocation3 + %s76]]
    %p78 = scmp.gt.s32.totalorder %s77, 0
    %s79 = scalar_select %p78, %s77, 0
    %p80 = scmp.lt.s32.totalorder %s79, 63
    %s81 = scalar_select %p80, %s79, 63
    %s82 = scalar_lea.vmem [#allocation4], %s81
    %v83 = vld [vmem:[%s82] sm:$0x1]
    %s84 = sadd.s32 %s28, 7
    %s85 = sld [smem:[#allocation3 + %s84]]
    %p86 = scmp.gt.s32.totalorder %s85, 0
    %s87 = scalar_select %p86, %s85, 0
    %p88 = scmp.lt.s32.totalorder %s87, 63
    %s89 = scalar_select %p88, %s87, 63
    %s90 = scalar_lea.vmem [#allocation4], %s89
    %v91 = vld [vmem:[%s90] sm:$0x1]
    %v93 = vrot.slane %v43, 7
    %v96 = vrot.slane %v51, 6
    %v99 = vrot.slane %v59, 5
    %v102 = vrot.slane %v67, 4
    %v105 = vrot.slane %v75, 3
    %v108 = vrot.slane %v83, 2
    %v111 = vrot.slane %v91, 1
    %vm113 = vcmask 1040384
    %v114 = vsel %vm113, %v35, %v93
    %vm115 = vcmask 1041408
    %v116 = vsel %vm115, %v114, %v96
    %vm117 = vcmask 1042432
    %v118 = vsel %vm117, %v116, %v99
    %vm119 = vcmask 1043456
    %v120 = vsel %vm119, %v118, %v102
    %vm121 = vcmask 1044480
    %v122 = vsel %vm121, %v120, %v105
    %vm123 = vcmask 1045504
    %v124 = vsel %vm123, %v122, %v108
    %vm125 = vcmask 1046528
    %v126 = vsel %vm125, %v124, %v111
    %127 = vst [vmem:[#allocation7] sm:$0xff] %v126
    %s128 = sadd.s32 %s28, 8
    %s129 = sld [smem:[#allocation3 + %s128]]
    %p130 = scmp.gt.s32.totalorder %s129, 0
    %s131 = scalar_select %p130, %s129, 0
    %p132 = scmp.lt.s32.totalorder %s131, 63
    %s133 = scalar_select %p132, %s131, 63
    %s134 = scalar_lea.vmem [#allocation4], %s133
    %v135 = vld [vmem:[%s134] sm:$0x1]
    %s136 = sadd.s32 %s28, 9
    %s137 = sld [smem:[#allocation3 + %s136]]
    %p138 = scmp.gt.s32.totalorder %s137, 0
    %s139 = scalar_select %p138, %s137, 0
    %p140 = scmp.lt.s32.totalorder %s139, 63
    %s141 = scalar_select %p140, %s139, 63
    %s142 = scalar_lea.vmem [#allocation4], %s141
    %v143 = vld [vmem:[%s142] sm:$0x1]
    %s144 = sadd.s32 %s28, 10
    %s145 = sld [smem:[#allocation3 + %s144]]
    %p146 = scmp.gt.s32.totalorder %s145, 0
    %s147 = scalar_select %p146, %s145, 0
    %p148 = scmp.lt.s32.totalorder %s147, 63
    %s149 = scalar_select %p148, %s147, 63
    %s150 = scalar_lea.vmem [#allocation4], %s149
    %v151 = vld [vmem:[%s150] sm:$0x1]
    %s152 = sadd.s32 %s28, 11
    %s153 = sld [smem:[#allocation3 + %s152]]
    %p154 = scmp.gt.s32.totalorder %s153, 0
    %s155 = scalar_select %p154, %s153, 0
    %p156 = scmp.lt.s32.totalorder %s155, 63
    %s157 = scalar_select %p156, %s155, 63
    %s158 = scalar_lea.vmem [#allocation4], %s157
    %v159 = vld [vmem:[%s158] sm:$0x1]
    %s160 = sadd.s32 %s28, 12
    %s161 = sld [smem:[#allocation3 + %s160]]
    %p162 = scmp.gt.s32.totalorder %s161, 0
    %s163 = scalar_select %p162, %s161, 0
    %p164 = scmp.lt.s32.totalorder %s163, 63
    %s165 = scalar_select %p164, %s163, 63
    %s166 = scalar_lea.vmem [#allocation4], %s165
    %v167 = vld [vmem:[%s166] sm:$0x1]
    %s168 = sadd.s32 %s28, 13
    %s169 = sld [smem:[#allocation3 + %s168]]
    %p170 = scmp.gt.s32.totalorder %s169, 0
    %s171 = scalar_select %p170, %s169, 0
    %p172 = scmp.lt.s32.totalorder %s171, 63
    %s173 = scalar_select %p172, %s171, 63
    %s174 = scalar_lea.vmem [#allocation4], %s173
    %v175 = vld [vmem:[%s174] sm:$0x1]
    %s176 = sadd.s32 %s28, 14
    %s177 = sld [smem:[#allocation3 + %s176]]
    %p178 = scmp.gt.s32.totalorder %s177, 0
    %s179 = scalar_select %p178, %s177, 0
    %p180 = scmp.lt.s32.totalorder %s179, 63
    %s181 = scalar_select %p180, %s179, 63
    %s182 = scalar_lea.vmem [#allocation4], %s181
    %v183 = vld [vmem:[%s182] sm:$0x1]
    %s184 = sadd.s32 %s28, 15
    %s185 = sld [smem:[#allocation3 + %s184]]
    %p186 = scmp.gt.s32.totalorder %s185, 0
    %s187 = scalar_select %p186, %s185, 0
    %p188 = scmp.lt.s32.totalorder %s187, 63
    %s189 = scalar_select %p188, %s187, 63
    %s190 = scalar_lea.vmem [#allocation4], %s189
    %v191 = vld [vmem:[%s190] sm:$0x1]
    %v193 = vrot.slane %v143, 7
    %v196 = vrot.slane %v151, 6
    %v199 = vrot.slane %v159, 5
    %v202 = vrot.slane %v167, 4
    %v205 = vrot.slane %v175, 3
    %v208 = vrot.slane %v183, 2
    %v211 = vrot.slane %v191, 1
    %v213 = vsel %vm113, %v135, %v193
    %v214 = vsel %vm115, %v213, %v196
    %v215 = vsel %vm117, %v214, %v199
    %v216 = vsel %vm119, %v215, %v202
    %v217 = vsel %vm121, %v216, %v205
    %v218 = vsel %vm123, %v217, %v208
    %v219 = vsel %vm125, %v218, %v211
    %220 = vst [vmem:[#allocation7 + $0x8] sm:$0xff] %v219
    // Predicated region
    $region10: #{tpu_custom_call.1} parent=1 // pred_check
      _
    $region11: #{tpu_custom_call.1} parent=1 // pred_check_branch
      %222 = sbr.rel (0) target = $region13
    $region12: #{tpu_custom_call.1} parent=1 // pred_region
      %s224 = ssub.s32 256, 256
      %225 = vsyncadd [#allocation6], %s224
      %s226 = sshll.u32 [#allocation7], 4
      %s227 = int_to_ptr.vmem [resolvable:$true] %s226
      %232 = dma.vmem_to_hbm [thread:$0]  %s227, 256, %s2, [#allocation6], 128, 128, 8
    $region13: #{tpu_custom_call.1} parent=1 // pred_fallthru
      _
    // Predicated region
    $region14: #{tpu_custom_call.1} parent=1 // pred_check
      _
    $region15: #{tpu_custom_call.1} parent=1 // pred_check_branch
      %234 = sbr.rel (0) target = $region17
    $region16: #{tpu_custom_call.1} parent=1 // pred_region
      %235 = dma.done [#allocation6], 256
    $region17: #{tpu_custom_call.1} parent=1 // pred_fallthru
      _
    %236 = vsyncpa [#allocation5], 1
    %237 = vsyncpa [#allocation6], 1

</llo_original>
